<compile_context>
chip_gen: v6e
topology: v6e:2x2x1
jax: 0.10.0
libtpu: 0.0.40
codegen_flags: <defaults>
</compile_context>

<pallas_src>
import functools

import jax
import jax.numpy as jnp
from jax import lax
from jax.experimental import pallas as pl
from jax.experimental.pallas import tpu as pltpu

_MIB = 1024 * 1024


# --------------------------------------------------------------------------
# VMEM budgeting (generation aware: 64 MiB/TC on v7x, 128 MiB on v5e/v6e).
# --------------------------------------------------------------------------
def _vmem_capacity_bytes():
    try:
        return int(pltpu.get_tpu_info().vmem_capacity_bytes)
    except Exception:
        return 64 * _MIB  # conservative default (v7x per-TensorCore VMEM)


def _vmem_budgets():
    cap = _vmem_capacity_bytes()
    vmem_limit = min(cap * 3 // 4, cap - 8 * _MIB)      # 48 MiB v7x / 96 MiB v6e
    block_budget = max(vmem_limit - 8 * _MIB, 8 * _MIB)  # 40 MiB v7x / 88 MiB v6e
    return block_budget, vmem_limit


def _round_up(x, m):
    return (x + m - 1) // m * m


def _pick_batch_block(b, c, hw_pad, itemsize, block_budget):
    """Largest batch block bb (divisor of b) whose double-buffered in+out
    blocks fit the VMEM budget.  Prefer an even number of grid steps so the
    v7x megacore (2 TensorCores sharding the 'parallel' axis) stays balanced.
    Returns None when even bb=1 does not fit -> caller uses the HW-tiled path."""
    def block_bytes(bb):
        return 4 * bb * c * hw_pad * itemsize  # 2 buffers x (in + out)

    fits = [d for d in range(1, b + 1) if b % d == 0 and block_bytes(d) <= block_budget]
    if not fits:
        return None
    even_steps = [d for d in fits if (b // d) % 2 == 0]
    pool = even_steps if even_steps else fits
    return max(pool)


# --------------------------------------------------------------------------
# Kernels
# --------------------------------------------------------------------------
def _caa_fused_kernel(x_ref, w1a_ref, w1m_ref, w2a_ref, w2m_ref, o_ref,
                      *, hw_valid, needs_mask):
    """One batch block: pooling + attention MLP + scale apply (all batched).

    x_ref            : (bb, C, HWp)  activations (lane-dim zero-padded)
    w1a_ref/w1m_ref  : (C, CR)       first 1x1 convs, transposed
    w2a_ref/w2m_ref  : (CR, C)       second 1x1 convs with the (2,1) conv fused
    o_ref            : (bb, C, HWp)
    """
    xf = x_ref[...].astype(jnp.float32)                      # (bb, C, HWp)

    # Pooled statistics (batched; zero padding is exact for the sum).
    avg = jnp.sum(xf, axis=-1) * jnp.float32(1.0 / hw_valid)  # (bb, C)
    if needs_mask:
        lane = lax.broadcasted_iota(jnp.int32, xf.shape, 2)
        xm = jnp.where(lane < hw_valid, xf, -jnp.inf)
    else:
        xm = xf
    mx = jnp.max(xm, axis=-1)                                  # (bb, C)

    # Attention MLP, batch on sublanes.  MXU cost is noise vs the DMA.
    ha = jnp.maximum(jnp.dot(avg, w1a_ref[...],
                             preferred_element_type=jnp.float32), 0.0)  # (bb, CR)
    hm = jnp.maximum(jnp.dot(mx, w1m_ref[...],
                             preferred_element_type=jnp.float32), 0.0)  # (bb, CR)
    z = (jnp.dot(ha, w2a_ref[...], preferred_element_type=jnp.float32)
         + jnp.dot(hm, w2m_ref[...], preferred_element_type=jnp.float32))  # (bb, C)
    scale = 1.0 / (1.0 + jnp.exp(-z))                           # sigmoid, f32

    # upsample_bilinear of a 1x1 map == broadcast; single multiply in x dtype.
    o_ref[...] = x_ref[...] * scale[:, :, None].astype(o_ref.dtype)


def _caa_pool_mlp_kernel(x_ref, w1a_ref, w1m_ref, w2a_ref, w2m_ref, scale_ref,
                         sum_acc, max_acc, *, hw_valid, hw_tile, needs_mask):
    """HW-tiled pooling (reduction over the second grid axis) + MLP finalize.

    x_ref     : (1, C, hw_tile)
    scale_ref : (1, C, 1)  written only on the last hw tile
    """
    t = pl.program_id(1)
    xf = x_ref[...].astype(jnp.float32)
    if needs_mask:
        lane = t * hw_tile + lax.broadcasted_iota(jnp.int32, xf.shape, 2)
        xm = jnp.where(lane < hw_valid, xf, -jnp.inf)
    else:
        xm = xf

    @pl.when(t == 0)
    def _():
        sum_acc[...] = jnp.zeros_like(sum_acc)
        max_acc[...] = jnp.full_like(max_acc, -jnp.inf)

    sum_acc[...] += jnp.sum(xf, axis=-1)                       # (1, C)
    max_acc[...] = jnp.maximum(max_acc[...], jnp.max(xm, axis=-1))

    @pl.when(t == pl.num_programs(1) - 1)
    def _():
        avg = sum_acc[...] * jnp.float32(1.0 / hw_valid)
        mx = max_acc[...]
        ha = jnp.maximum(jnp.dot(avg, w1a_ref[...],
                                 preferred_element_type=jnp.float32), 0.0)
        hm = jnp.maximum(jnp.dot(mx, w1m_ref[...],
                                 preferred_element_type=jnp.float32), 0.0)
        z = (jnp.dot(ha, w2a_ref[...], preferred_element_type=jnp.float32)
             + jnp.dot(hm, w2m_ref[...], preferred_element_type=jnp.float32))
        scale_ref[...] = (1.0 / (1.0 + jnp.exp(-z)))[:, :, None]   # (1, C, 1)


def _caa_apply_kernel(x_ref, scale_ref, o_ref):
    """x * scale with per-(b, c) scale broadcast over the lane dim."""
    o_ref[...] = x_ref[...] * scale_ref[...].astype(o_ref.dtype)


# --------------------------------------------------------------------------
# Wrapper
# --------------------------------------------------------------------------
def _prep_weights(w1a, w2a, w1m, w2m, wconv):
    """Fuse the (2,1) conv into the second 1x1 convs (exact: ReLU only sits
    between layer 1 and layer 2) and transpose so batch stays on sublanes."""
    wc0 = wconv[:, :, 0, 0].astype(jnp.float32)   # acts on avg branch
    wc1 = wconv[:, :, 1, 0].astype(jnp.float32)   # acts on max branch
    w1a_t = w1a.astype(jnp.float32).T              # (C, CR)
    w1m_t = w1m.astype(jnp.float32).T              # (C, CR)
    w2a_t = (wc0 @ w2a.astype(jnp.float32)).T      # (CR, C)
    w2m_t = (wc1 @ w2m.astype(jnp.float32)).T      # (CR, C)
    return w1a_t, w1m_t, w2a_t, w2m_t


def caa_forward(x_nchw, w1a, w2a, w1m, w2m, wconv,
                force_hw_tiling=False, hw_tile_override=None):
    """CAA forward.  x_nchw: (B, C, H, W); weights as in the PyTorch module.
    Pass bf16 x for ~2x HBM-roofline speedup; accumulation stays in f32."""
    b, c, h, w = x_nchw.shape
    hw = h * w
    cr = w1a.shape[0]
    itemsize = jnp.dtype(x_nchw.dtype).itemsize
    w1a_t, w1m_t, w2a_t, w2m_t = _prep_weights(w1a, w2a, w1m, w2m, wconv)
    block_budget, vmem_limit = _vmem_budgets()

    bb = None
    if not force_hw_tiling:
        hw_pad = _round_up(hw, 128)
        bb = _pick_batch_block(b, c, hw_pad, itemsize, block_budget)

    # ---------------- primary: single fused kernel -------------------------
    if bb is not None:
        needs_mask = hw_pad != hw
        x_flat = x_nchw.reshape(b, c, hw)
        if needs_mask:
            # Zero-pad lanes to a multiple of 128 so the bulk store is unmasked.
            x_flat = jnp.pad(x_flat, ((0, 0), (0, 0), (0, hw_pad - hw)))
        nb = b // bb

        cost = pl.CostEstimate(
            flops=int(3 * b * c * hw_pad + 8 * b * c * cr),
            transcendentals=int(b * c),
            bytes_accessed=int(2 * b * c * hw_pad * itemsize + 16 * c * cr))

        out = pl.pallas_call(
            functools.partial(_caa_fused_kernel,
                              hw_valid=hw, needs_mask=needs_mask),
            out_shape=jax.ShapeDtypeStruct((b, c, hw_pad), x_flat.dtype),
            grid_spec=pltpu.PrefetchScalarGridSpec(
                num_scalar_prefetch=0,
                grid=(nb,),
                in_specs=[
                    pl.BlockSpec((bb, c, hw_pad), lambda i: (i, 0, 0)),
                    pl.BlockSpec((c, cr), lambda i: (0, 0)),
                    pl.BlockSpec((c, cr), lambda i: (0, 0)),
                    pl.BlockSpec((cr, c), lambda i: (0, 0)),
                    pl.BlockSpec((cr, c), lambda i: (0, 0)),
                ],
                out_specs=pl.BlockSpec((bb, c, hw_pad), lambda i: (i, 0, 0)),
            ),
            compiler_params=pltpu.CompilerParams(
                dimension_semantics=("parallel",),
                vmem_limit_bytes=vmem_limit),
            cost_estimate=cost,
        )(x_flat, w1a_t, w1m_t, w2a_t, w2m_t)

        if needs_mask:
            out = out[:, :, :hw]
        return out.reshape(b, c, h, w)

    # ---------------- fallback: HW-tiled two-kernel split ------------------
    if hw_tile_override is not None:
        hw_tile = _round_up(int(hw_tile_override), 128)
    else:
        hw_tile = max(128, (block_budget // (4 * c * itemsize)) // 128 * 128)
    hw_pad = _round_up(hw, hw_tile)
    n_hw = hw_pad // hw_tile
    needs_mask = hw_pad != hw

    x_flat = x_nchw.reshape(b, c, hw)
    if needs_mask:
        x_flat = jnp.pad(x_flat, ((0, 0), (0, 0), (0, hw_pad - hw)))

    scale = pl.pallas_call(
        functools.partial(_caa_pool_mlp_kernel,
                          hw_valid=hw, hw_tile=hw_tile, needs_mask=needs_mask),
        out_shape=jax.ShapeDtypeStruct((b, c, 1), jnp.float32),
        grid_spec=pltpu.PrefetchScalarGridSpec(
            num_scalar_prefetch=0,
            grid=(b, n_hw),
            in_specs=[
                pl.BlockSpec((1, c, hw_tile), lambda i, t: (i, 0, t)),
                pl.BlockSpec((c, cr), lambda i, t: (0, 0)),
                pl.BlockSpec((c, cr), lambda i, t: (0, 0)),
                pl.BlockSpec((cr, c), lambda i, t: (0, 0)),
                pl.BlockSpec((cr, c), lambda i, t: (0, 0)),
            ],
            out_specs=pl.BlockSpec((1, c, 1), lambda i, t: (i, 0, 0)),
            scratch_shapes=[pltpu.VMEM((1, c), jnp.float32),
                            pltpu.VMEM((1, c), jnp.float32)],
        ),
        compiler_params=pltpu.CompilerParams(
            dimension_semantics=("parallel", "arbitrary"),
            vmem_limit_bytes=vmem_limit),
        cost_estimate=pl.CostEstimate(
            flops=int(2 * b * c * hw_pad + 8 * b * c * cr),
            transcendentals=int(b * c),
            bytes_accessed=int(b * c * hw_pad * itemsize + 16 * c * cr + 4 * b * c)),
    )(x_flat, w1a_t, w1m_t, w2a_t, w2m_t)

    out = pl.pallas_call(
        _caa_apply_kernel,
        out_shape=jax.ShapeDtypeStruct((b, c, hw_pad), x_flat.dtype),
        grid_spec=pltpu.PrefetchScalarGridSpec(
            num_scalar_prefetch=0,
            grid=(b, n_hw),
            in_specs=[
                pl.BlockSpec((1, c, hw_tile), lambda i, t: (i, 0, t)),
                pl.BlockSpec((1, c, 1), lambda i, t: (i, 0, 0)),
            ],
            out_specs=pl.BlockSpec((1, c, hw_tile), lambda i, t: (i, 0, t)),
        ),
        compiler_params=pltpu.CompilerParams(
            dimension_semantics=("parallel", "parallel"),
            vmem_limit_bytes=vmem_limit),
        cost_estimate=pl.CostEstimate(
            flops=int(b * c * hw_pad),
            transcendentals=0,
            bytes_accessed=int(2 * b * c * hw_pad * itemsize + 4 * b * c)),
    )(x_flat, scale)

    if needs_mask:
        out = out[:, :, :hw]
    return out.reshape(b, c, h, w)


# --------------------------------------------------------------------------
# Pure-JAX reference of the PyTorch forward (for verification)
# --------------------------------------------------------------------------
def caa_reference(x, w1a, w2a, w1m, w2m, wconv):
    xf = x.astype(jnp.float32)
    avg = jnp.mean(xf, axis=(2, 3))                    # (B, C)
    mx = jnp.max(xf, axis=(2, 3))                      # (B, C)
    att_avg = jnp.maximum(avg @ w1a.T, 0.0) @ w2a.T    # (B, C)
    att_max = jnp.maximum(mx @ w1m.T, 0.0) @ w2m.T     # (B, C)
    wc0 = wconv[:, :, 0, 0]
    wc1 = wconv[:, :, 1, 0]
    z = att_avg @ wc0.T + att_max @ wc1.T              # (B, C)
    scale = jax.nn.sigmoid(z)[:, :, None, None]        # (B, C, 1, 1)
    return xf * scale


if __name__ == "__main__":
    # Module config: gate_channels=32, reduction_ratio=4 -> hidden = 8.
    B, C, H, W = 2, 32, 16, 16
    R = 4
    CR = C // R

    key = jax.random.PRNGKey(0)
    kx, kx2, k1, k2, k3, k4, k5 = jax.random.split(key, 7)

    w1a = jax.random.normal(k1, (CR, C), jnp.float32) * (1.0 / jnp.sqrt(C))
    w2a = jax.random.normal(k2, (C, CR), jnp.float32) * (1.0 / jnp.sqrt(CR))
    w1m = jax.random.normal(k3, (CR, C), jnp.float32) * (1.0 / jnp.sqrt(C))
    w2m = jax.random.normal(k4, (C, CR), jnp.float32) * (1.0 / jnp.sqrt(CR))
    wconv = jax.random.normal(k5, (C, C, 2, 1), jnp.float32) * (1.0 / jnp.sqrt(2 * C))
    weights = (w1a, w2a, w1m, w2m, wconv)

    # 1) primary fused path, f32, lane-dense H*W.
    x = jax.random.normal(kx, (B, C, H, W), jnp.float32)
    out = jax.block_until_ready(caa_forward(x, *weights))
    ref = caa_reference(x, *weights)
    assert out.shape == x.shape and out.dtype == x.dtype
    assert jnp.allclose(out, ref, atol=1e-4, rtol=1e-4)

    # 2) non-128-multiple spatial size -> lane padding + in-kernel masked max.
    x2 = jax.random.normal(kx2, (B, C, 14, 14), jnp.float32)
    out2 = jax.block_until_ready(caa_forward(x2, *weights))
    assert jnp.allclose(out2, caa_reference(x2, *weights), atol=1e-4, rtol=1e-4)

    # 3) HW-tiled two-kernel fallback (forced here to exercise the path).
    out3 = jax.block_until_ready(
        caa_forward(x, *weights, force_hw_tiling=True, hw_tile_override=128))
    assert jnp.allclose(out3, ref, atol=1e-4, rtol=1e-4)

    # 4) bf16 I/O (recommended production dtype: the kernel is HBM-bound).
    xb = x.astype(jnp.bfloat16)
    out4 = jax.block_until_ready(caa_forward(xb, *weights))
    ref4 = caa_reference(xb, *weights)
    assert out4.dtype == jnp.bfloat16
    assert jnp.allclose(out4.astype(jnp.float32), ref4, atol=5e-2, rtol=5e-2)

    print("KERNEL_OK")
</pallas_src>

<mosaic_0001>
module attributes {stable_mosaic.version = 11 : i64} {
  func.func @_caa_fused_kernel(%arg0: i32, %arg1: memref<1x32x256xf32, #tpu.memory_space<vmem>>, %arg2: memref<32x8xf32, #tpu.memory_space<vmem>>, %arg3: memref<32x8xf32, #tpu.memory_space<vmem>>, %arg4: memref<8x32xf32, #tpu.memory_space<vmem>>, %arg5: memref<8x32xf32, #tpu.memory_space<vmem>>, %arg6: memref<1x32x256xf32, #tpu.memory_space<vmem>>) attributes {dimension_semantics = [#tpu.dimension_semantics<parallel>], iteration_bounds = array<i64: 2>, scalar_prefetch = 0 : i64, scratch_operands = 0 : i64, tpu.core_type = #tpu.core_type<tc>, window_params = [{transform_indices = @transform_0, window_bounds = array<i64: 1, 32, 256>}, {pipeline_mode = #tpu.pipeline_mode<synchronous>, transform_indices = @transform_1, window_bounds = array<i64: 32, 8>}, {pipeline_mode = #tpu.pipeline_mode<synchronous>, transform_indices = @transform_2, window_bounds = array<i64: 32, 8>}, {pipeline_mode = #tpu.pipeline_mode<synchronous>, transform_indices = @transform_3, window_bounds = array<i64: 8, 32>}, {pipeline_mode = #tpu.pipeline_mode<synchronous>, transform_indices = @transform_4, window_bounds = array<i64: 8, 32>}, {transform_indices = @transform_5, window_bounds = array<i64: 1, 32, 256>}]} {
    %c0 = arith.constant 0 : index
    %c0_0 = arith.constant 0 : index
    %c0_1 = arith.constant 0 : index
    %0 = vector.load %arg1[%c0, %c0_0, %c0_1] : memref<1x32x256xf32, #tpu.memory_space<vmem>>, vector<1x32x256xf32>
    %cst = arith.constant dense<0.000000e+00> : vector<1x32xf32>
    %1 = vector.multi_reduction <add>, %0, %cst [2] : vector<1x32x256xf32> to vector<1x32xf32>
    %cst_2 = arith.constant 3.906250e-03 : f32
    %2 = vector.broadcast %cst_2 : f32 to vector<1x32xf32>
    %3 = arith.mulf %1, %2 : vector<1x32xf32>
    %cst_3 = arith.constant dense<0xFF800000> : vector<1x32xf32>
    %4 = vector.multi_reduction <maximumf>, %0, %cst_3 [2] : vector<1x32x256xf32> to vector<1x32xf32>
    %c0_4 = arith.constant 0 : index
    %c0_5 = arith.constant 0 : index
    %5 = vector.load %arg2[%c0_4, %c0_5] : memref<32x8xf32, #tpu.memory_space<vmem>>, vector<32x8xf32>
    %cst_6 = arith.constant dense<0.000000e+00> : vector<1x8xf32>
    %6 = tpu.matmul %3, %5, %cst_6 {dimension_numbers = #tpu.dot_dimension_numbers<[1], [0], [0], [1], [0, 0, 1, 1], [], []>} : vector<1x32xf32>, vector<32x8xf32>, vector<1x8xf32> -> vector<1x8xf32>
    %cst_7 = arith.constant 0.000000e+00 : f32
    %7 = vector.broadcast %cst_7 : f32 to vector<1x8xf32>
    %8 = arith.maximumf %6, %7 : vector<1x8xf32>
    %c0_8 = arith.constant 0 : index
    %c0_9 = arith.constant 0 : index
    %9 = vector.load %arg3[%c0_8, %c0_9] : memref<32x8xf32, #tpu.memory_space<vmem>>, vector<32x8xf32>
    %cst_10 = arith.constant dense<0.000000e+00> : vector<1x8xf32>
    %10 = tpu.matmul %4, %9, %cst_10 {dimension_numbers = #tpu.dot_dimension_numbers<[1], [0], [0], [1], [0, 0, 1, 1], [], []>} : vector<1x32xf32>, vector<32x8xf32>, vector<1x8xf32> -> vector<1x8xf32>
    %cst_11 = arith.constant 0.000000e+00 : f32
    %11 = vector.broadcast %cst_11 : f32 to vector<1x8xf32>
    %12 = arith.maximumf %10, %11 : vector<1x8xf32>
    %c0_12 = arith.constant 0 : index
    %c0_13 = arith.constant 0 : index
    %13 = vector.load %arg4[%c0_12, %c0_13] : memref<8x32xf32, #tpu.memory_space<vmem>>, vector<8x32xf32>
    %cst_14 = arith.constant dense<0.000000e+00> : vector<1x32xf32>
    %14 = tpu.matmul %8, %13, %cst_14 {dimension_numbers = #tpu.dot_dimension_numbers<[1], [0], [0], [1], [0, 0, 1, 1], [], []>} : vector<1x8xf32>, vector<8x32xf32>, vector<1x32xf32> -> vector<1x32xf32>
    %c0_15 = arith.constant 0 : index
    %c0_16 = arith.constant 0 : index
    %15 = vector.load %arg5[%c0_15, %c0_16] : memref<8x32xf32, #tpu.memory_space<vmem>>, vector<8x32xf32>
    %cst_17 = arith.constant dense<0.000000e+00> : vector<1x32xf32>
    %16 = tpu.matmul %12, %15, %cst_17 {dimension_numbers = #tpu.dot_dimension_numbers<[1], [0], [0], [1], [0, 0, 1, 1], [], []>} : vector<1x8xf32>, vector<8x32xf32>, vector<1x32xf32> -> vector<1x32xf32>
    %17 = arith.addf %14, %16 : vector<1x32xf32>
    %cst_18 = arith.constant 0.000000e+00 : f32
    %18 = vector.broadcast %cst_18 : f32 to vector<1x32xf32>
    %19 = arith.subf %18, %17 : vector<1x32xf32>
    %20 = math.exp %19 : vector<1x32xf32>
    %cst_19 = arith.constant 1.000000e+00 : f32
    %21 = vector.broadcast %cst_19 : f32 to vector<1x32xf32>
    %22 = arith.addf %21, %20 : vector<1x32xf32>
    %cst_20 = arith.constant 1.000000e+00 : f32
    %23 = vector.broadcast %cst_20 : f32 to vector<1x32xf32>
    %24 = arith.divf %23, %22 : vector<1x32xf32>
    %c0_21 = arith.constant 0 : index
    %c0_22 = arith.constant 0 : index
    %c0_23 = arith.constant 0 : index
    %25 = vector.load %arg1[%c0_21, %c0_22, %c0_23] : memref<1x32x256xf32, #tpu.memory_space<vmem>>, vector<1x32x256xf32>
    %26 = vector.shape_cast %24 : vector<1x32xf32> to vector<1x32x1xf32>
    %27 = vector.broadcast %26 : vector<1x32x1xf32> to vector<1x32x256xf32>
    %28 = arith.mulf %25, %27 : vector<1x32x256xf32>
    %c0_24 = arith.constant 0 : index
    %c0_25 = arith.constant 0 : index
    %c0_26 = arith.constant 0 : index
    %29 = vector.load %arg6[%c0_24, %c0_25, %c0_26] : memref<1x32x256xf32, #tpu.memory_space<vmem>>, vector<1x32x256xf32>
    tpu.vector_store %arg6[%c0_24, %c0_25, %c0_26], %28 {strides = array<i32>} : memref<1x32x256xf32, #tpu.memory_space<vmem>>, vector<1x32x256xf32>,
    return
  }
  func.func @transform_0(%arg0: i32) -> (i32, i32, i32) {
    %c0_i32 = arith.constant 0 : i32
    %c0_i32_0 = arith.constant 0 : i32
    %c0_i32_1 = arith.constant 0 : i32
    return %arg0, %c0_i32, %c0_i32_0 : i32, i32, i32
  }
  func.func @transform_1(%arg0: i32) -> (i32, i32) {
    %c0_i32 = arith.constant 0 : i32
    %c0_i32_0 = arith.constant 0 : i32
    %c0_i32_1 = arith.constant 0 : i32
    return %c0_i32, %c0_i32_0 : i32, i32
  }
  func.func @transform_2(%arg0: i32) -> (i32, i32) {
    %c0_i32 = arith.constant 0 : i32
    %c0_i32_0 = arith.constant 0 : i32
    %c0_i32_1 = arith.constant 0 : i32
    return %c0_i32, %c0_i32_0 : i32, i32
  }
  func.func @transform_3(%arg0: i32) -> (i32, i32) {
    %c0_i32 = arith.constant 0 : i32
    %c0_i32_0 = arith.constant 0 : i32
    %c0_i32_1 = arith.constant 0 : i32
    return %c0_i32, %c0_i32_0 : i32, i32
  }
  func.func @transform_4(%arg0: i32) -> (i32, i32) {
    %c0_i32 = arith.constant 0 : i32
    %c0_i32_0 = arith.constant 0 : i32
    %c0_i32_1 = arith.constant 0 : i32
    return %c0_i32, %c0_i32_0 : i32, i32
  }
  func.func @transform_5(%arg0: i32) -> (i32, i32, i32) {
    %c0_i32 = arith.constant 0 : i32
    %c0_i32_0 = arith.constant 0 : i32
    %c0_i32_1 = arith.constant 0 : i32
    return %arg0, %c0_i32, %c0_i32_0 : i32, i32, i32
  }
}

</mosaic_0001>

<llo_original>
// kernel: tpu_custom_call.1
$region0: #{tpu_custom_call.1}
  #allocation0 [shape = 'u32[]', space=smem, size = 0x4, offset = 0x4, fixed_abs, tag = 'smem constant byte address 0x4 - core index']
  #allocation1 [shape = 'u32[144,128]{1,0:T(1,128)}', space=vmem, size = 0x12000, scoped, tag = 'internal scratch']
  %s0 = inlined_call_operand.hbm [shape: f32[2,32,256], index: 0, kind: input, shape index: {}]
  %s1 = inlined_call_operand.vmem [shape: f32[32,8], index: 1, kind: input, shape index: {}]
  %s2 = inlined_call_operand.vmem [shape: f32[32,8], index: 2, kind: input, shape index: {}]
  %s3 = inlined_call_operand.vmem [shape: f32[8,32], index: 3, kind: input, shape index: {}]
  %s4 = inlined_call_operand.vmem [shape: f32[8,32], index: 4, kind: input, shape index: {}]
  %s5 = inlined_call_operand.hbm [shape: f32[2,32,256], index: 5, kind: output, shape index: {}]
  %s6 = sld [smem:[#allocation0]]
  $region57: #{tpu_custom_call.1} parent=0
    _
  %s8 = ssub.s32 1, %s6
  %s9 = scalar_select 0, %s8, %s6
  $region1: #{tpu_custom_call.1} parent=0
    #allocation2 [shape = 'u8[65536]{0}', space=vmem, size = 0x10000, scoped, tag = 'input window, operand 0']
    #allocation3 [shape = 's32[2]{0}', space=sflag, size = 0x8, scoped, tag = 'scoped memory for tpu_custom_call.1']
    #allocation4 [shape = 's32[2]{0}', space=sflag, size = 0x8, scoped, tag = 'scoped memory for tpu_custom_call.1']
    #allocation5 [shape = 'u8[65536]{0}', space=vmem, size = 0x10000, scoped, tag = 'output window, operand 0']
    %10 = vsyncpa [#allocation3], 0
    %s11 = scalar_lea.sflag [#allocation3], 1
    %12 = vsyncpa %s11, 0
    %13 = vsyncpa [#allocation4], 0
    %s14 = scalar_lea.sflag [#allocation4], 1
    %15 = vsyncpa %s14, 0
    loop: start=0, step=1, limit=4
    $region2: #{tpu_custom_call.1} parent=1 // loop_pre_header
      _
    $region3: #{tpu_custom_call.1} parent=1 // loop_header
      %s17 = sphi 0, %s21
      %p18 = scmp.ge.s32.totalorder %s17, 4
      %s27 = sphi 0, %s29
      %s30 = sphi 0, %s27
      %s31 = sphi 0, %s30
      %s47 = sphi 0, %s31
      %s51 = sphi 0, %s51
      %s53 = sphi 0, %s51
      %s54 = sphi 0, %s53
      %s68 = sphi 0, %s54
      %s72 = sphi 0, %s72
      %s74 = sphi 0, %s72
      %s75 = sphi 0, %s74
      %s89 = sphi 0, %s75
      %s93 = sphi 0, %s93
      %s95 = sphi 0, %s93
      %s96 = sphi 0, %s95
      %s110 = sphi 0, %s96
      %s114 = sphi 0, %s114
      %s116 = sphi 0, %s114
      %s117 = sphi 0, %s116
      %s131 = sphi 0, %s117
      %s137 = sphi 0, %s139
      %s140 = sphi 0, %s137
      %s141 = sphi 0, %s140
      %s157 = sphi 0, %s141
    $region4: #{tpu_custom_call.1} parent=1 // loop_header_branch
      %20 = sbr.rel (%p18) target = $region8
    $region5: #{tpu_custom_call.1} parent=1 // loop_body
      %s22 = ssub.s32 %s17, 1
      %s23 = ssub.s32 %s17, 2
      %s24 = sadd.s32 %s17, 1
      %s25 = ssub.s32 %s17, %s24
      %p26 = scmp.eq.s32.totalorder %s25, 0
      %s28 = sadd.s32 %s27, 1
      %s29 = scalar_select %p26, %s27, %s28
      %p32 = pneg %p26
      %p33 = scmp.eq.s32.totalorder %s17, 1
      %p34 = por %p32, %p33
      %p35 = scmp.ne.s32.totalorder %s27, %s30
      %p36 = scmp.eq.s32.totalorder %s17, 0
      %p37 = por %p35, %p36
      %p38 = scmp.ne.s32.totalorder %s27, %s30
      %p39 = scmp.eq.s32.totalorder %s22, 1
      %p40 = por %p38, %p39
      %p41 = scmp.ne.s32.totalorder %s30, %s31
      %p42 = scmp.eq.s32.totalorder %s22, 0
      %p43 = por %p41, %p42
      %p44 = scmp.ne.s32.totalorder %s30, %s31
      %p45 = scmp.eq.s32.totalorder %s23, 1
      %p46 = por %p44, %p45
      %p48 = scmp.ne.s32.totalorder %s31, %s47
      %p49 = scmp.eq.s32.totalorder %s23, 0
      %p50 = por %p48, %p49
      %s52 = sadd.s32 %s51, 1
      %p55 = scmp.eq.s32.totalorder %s17, 1
      %p56 = scmp.ne.s32.totalorder %s51, %s53
      %p57 = scmp.eq.s32.totalorder %s17, 0
      %p58 = por %p56, %p57
      %p59 = scmp.ne.s32.totalorder %s51, %s53
      %p60 = scmp.eq.s32.totalorder %s22, 1
      %p61 = por %p59, %p60
      %p62 = scmp.ne.s32.totalorder %s53, %s54
      %p63 = scmp.eq.s32.totalorder %s22, 0
      %p64 = por %p62, %p63
      %p65 = scmp.ne.s32.totalorder %s53, %s54
      %p66 = scmp.eq.s32.totalorder %s23, 1
      %p67 = por %p65, %p66
      %p69 = scmp.ne.s32.totalorder %s54, %s68
      %p70 = scmp.eq.s32.totalorder %s23, 0
      %p71 = por %p69, %p70
      %s73 = sadd.s32 %s72, 1
      %p76 = scmp.eq.s32.totalorder %s17, 1
      %p77 = scmp.ne.s32.totalorder %s72, %s74
      %p78 = scmp.eq.s32.totalorder %s17, 0
      %p79 = por %p77, %p78
      %p80 = scmp.ne.s32.totalorder %s72, %s74
      %p81 = scmp.eq.s32.totalorder %s22, 1
      %p82 = por %p80, %p81
      %p83 = scmp.ne.s32.totalorder %s74, %s75
      %p84 = scmp.eq.s32.totalorder %s22, 0
      %p85 = por %p83, %p84
      %p86 = scmp.ne.s32.totalorder %s74, %s75
      %p87 = scmp.eq.s32.totalorder %s23, 1
      %p88 = por %p86, %p87
      %p90 = scmp.ne.s32.totalorder %s75, %s89
      %p91 = scmp.eq.s32.totalorder %s23, 0
      %p92 = por %p90, %p91
      %s94 = sadd.s32 %s93, 1
      %p97 = scmp.eq.s32.totalorder %s17, 1
      %p98 = scmp.ne.s32.totalorder %s93, %s95
      %p99 = scmp.eq.s32.totalorder %s17, 0
      %p100 = por %p98, %p99
      %p101 = scmp.ne.s32.totalorder %s93, %s95
      %p102 = scmp.eq.s32.totalorder %s22, 1
      %p103 = por %p101, %p102
      %p104 = scmp.ne.s32.totalorder %s95, %s96
      %p105 = scmp.eq.s32.totalorder %s22, 0
      %p106 = por %p104, %p105
      %p107 = scmp.ne.s32.totalorder %s95, %s96
      %p108 = scmp.eq.s32.totalorder %s23, 1
      %p109 = por %p107, %p108
      %p111 = scmp.ne.s32.totalorder %s96, %s110
      %p112 = scmp.eq.s32.totalorder %s23, 0
      %p113 = por %p111, %p112
      %s115 = sadd.s32 %s114, 1
      %p118 = scmp.eq.s32.totalorder %s17, 1
      %p119 = scmp.ne.s32.totalorder %s114, %s116
      %p120 = scmp.eq.s32.totalorder %s17, 0
      %p121 = por %p119, %p120
      %p122 = scmp.ne.s32.totalorder %s114, %s116
      %p123 = scmp.eq.s32.totalorder %s22, 1
      %p124 = por %p122, %p123
      %p125 = scmp.ne.s32.totalorder %s116, %s117
      %p126 = scmp.eq.s32.totalorder %s22, 0
      %p127 = por %p125, %p126
      %p128 = scmp.ne.s32.totalorder %s116, %s117
      %p129 = scmp.eq.s32.totalorder %s23, 1
      %p130 = por %p128, %p129
      %p132 = scmp.ne.s32.totalorder %s117, %s131
      %p133 = scmp.eq.s32.totalorder %s23, 0
      %p134 = por %p132, %p133
      %s135 = ssub.s32 %s17, %s24
      %p136 = scmp.eq.s32.totalorder %s135, 0
      %s138 = sadd.s32 %s137, 1
      %s139 = scalar_select %p136, %s137, %s138
      %p142 = pneg %p136
      %p143 = scmp.eq.s32.totalorder %s17, 1
      %p144 = por %p142, %p143
      %p145 = scmp.ne.s32.totalorder %s137, %s140
      %p146 = scmp.eq.s32.totalorder %s17, 0
      %p147 = por %p145, %p146
      %p148 = scmp.ne.s32.totalorder %s137, %s140
      %p149 = scmp.eq.s32.totalorder %s22, 1
      %p150 = por %p148, %p149
      %p151 = scmp.ne.s32.totalorder %s140, %s141
      %p152 = scmp.eq.s32.totalorder %s22, 0
      %p153 = por %p151, %p152
      %p154 = scmp.ne.s32.totalorder %s140, %s141
      %p155 = scmp.eq.s32.totalorder %s23, 1
      %p156 = por %p154, %p155
      %p158 = scmp.ne.s32.totalorder %s141, %s157
      %p159 = scmp.eq.s32.totalorder %s23, 0
      %p160 = por %p158, %p159
      %p161 = scmp.le.s32.totalorder 1, %s17
      %p162 = scmp.lt.s32.totalorder %s17, 3
      %p163 = pnand %p161, %p162
      %p164 = pneg %p163
      // Predicated region
      $region9: #{tpu_custom_call.1} parent=5 // pred_check
        _
      $region10: #{tpu_custom_call.1} parent=5 // pred_check_branch
        %166 = sbr.rel (%p163) target = $region12
      $region11: #{tpu_custom_call.1} parent=5 // pred_region
        %s167 = ssub.s32 %s17, 1
        // Predicated region
        $region13: #{tpu_custom_call.1} parent=11 // pred_check
          %p168 = pneg %p64
        $region14: #{tpu_custom_call.1} parent=11 // pred_check_branch
          %170 = sbr.rel (%p168) target = $region16
        $region15: #{tpu_custom_call.1} parent=11 // pred_region
          _
        $region16: #{tpu_custom_call.1} parent=11 // pred_fallthru
          _
        // Predicated region
        $region17: #{tpu_custom_call.1} parent=11 // pred_check
          %p171 = pneg %p85
        $region18: #{tpu_custom_call.1} parent=11 // pred_check_branch
          %173 = sbr.rel (%p171) target = $region20
        $region19: #{tpu_custom_call.1} parent=11 // pred_region
          _
        $region20: #{tpu_custom_call.1} parent=11 // pred_fallthru
          _
        // Predicated region
        $region21: #{tpu_custom_call.1} parent=11 // pred_check
          %p174 = pneg %p106
        $region22: #{tpu_custom_call.1} parent=11 // pred_check_branch
          %176 = sbr.rel (%p174) target = $region24
        $region23: #{tpu_custom_call.1} parent=11 // pred_region
          _
        $region24: #{tpu_custom_call.1} parent=11 // pred_fallthru
          _
        // Predicated region
        $region25: #{tpu_custom_call.1} parent=11 // pred_check
          %p177 = pneg %p127
        $region26: #{tpu_custom_call.1} parent=11 // pred_check_branch
          %179 = sbr.rel (%p177) target = $region28
        $region27: #{tpu_custom_call.1} parent=11 // pred_region
          _
        $region28: #{tpu_custom_call.1} parent=11 // pred_fallthru
          _
      $region12: #{tpu_custom_call.1} parent=5 // pred_fallthru
        _
      %p180 = scmp.lt.s32.totalorder %s17, 2
      // Predicated region
      $region29: #{tpu_custom_call.1} parent=5 // pred_check
        %p181 = pneg %p180
      $region30: #{tpu_custom_call.1} parent=5 // pred_check_branch
        %183 = sbr.rel (%p181) target = $region32
      $region31: #{tpu_custom_call.1} parent=5 // pred_region
        // Predicated region
        $region33: #{tpu_custom_call.1} parent=31 // pred_check
          %p184 = pneg %p37
        $region34: #{tpu_custom_call.1} parent=31 // pred_check_branch
          %186 = sbr.rel (%p184) target = $region36
        $region35: #{tpu_custom_call.1} parent=31 // pred_region
          %s187 = sand.u32 %s27, 1
          %s188 = scalar_lea.sflag [#allocation3], %s187
          %s189 = sand.u32 %s27, 1
          %s190 = smul.addr %s189, 64
          %s191 = scalar_lea.vmem [#allocation2], %s190
          %s193 = ssub.s32 1024, 1024
          %194 = vsyncadd %s188, %s193
          %s195 = smul.addr %s17, 8
          %s196 = smul.addr %s195, 128
          %s197 = scalar_lea.hbm %s0, %s196
          %s198 = sshll.u32 %s191, 4
          %s199 = int_to_ptr.vmem [resolvable:$true] %s198
          %204 = dma.hbm_to_vmem [thread:$0]  %s197, 1024, %s199, %s188, 256, 256, 16
        $region36: #{tpu_custom_call.1} parent=31 // pred_fallthru
          _
      $region32: #{tpu_custom_call.1} parent=5 // pred_fallthru
        _
      %p205 = scmp.le.s32.totalorder 1, %s17
      %p206 = scmp.lt.s32.totalorder %s17, 3
      %p207 = pnand %p205, %p206
      %p208 = pneg %p207
      // Predicated region
      $region37: #{tpu_custom_call.1} parent=5 // pred_check
        _
      $region38: #{tpu_custom_call.1} parent=5 // pred_check_branch
        %210 = sbr.rel (%p207) target = $region40
      $region39: #{tpu_custom_call.1} parent=5 // pred_region
        %s211 = ssub.s32 %s17, 1
        %s212 = sand.u32 %s30, 1
        %s213 = scalar_lea.sflag [#allocation3], %s212
        %s214 = sand.u32 %s30, 1
        %s215 = smul.addr %s214, 64
        %s216 = scalar_lea.vmem [#allocation2], %s215
        // Predicated region
        $region41: #{tpu_custom_call.1} parent=39 // pred_check
          %p217 = pneg %p43
        $region42: #{tpu_custom_call.1} parent=39 // pred_check_branch
          %219 = sbr.rel (%p217) target = $region44
        $region43: #{tpu_custom_call.1} parent=39 // pred_region
          %220 = dma.done %s213, 1024
        $region44: #{tpu_custom_call.1} parent=39 // pred_fallthru
          _
        %s221 = sand.u32 %s30, 1
        %s222 = scalar_lea.sflag [#allocation3], %s221
        %s223 = sand.u32 %s30, 1
        %s224 = smul.addr %s223, 64
        %s225 = scalar_lea.vmem [#allocation2], %s224
        %p226 = pneg %p43
        %p227 = pneg %p40
        %p228 = pneg %p64
        %p229 = pneg %p61
        %p230 = pneg %p85
        %p231 = pneg %p82
        %p232 = pneg %p106
        %p233 = pneg %p103
        %p234 = pneg %p127
        %p235 = pneg %p124
        %p236 = pneg %p153
        %p237 = pneg %p150
        %s238 = sand.u32 %s140, 1
        %s239 = scalar_lea.sflag [#allocation4], %s238
        %s240 = sand.u32 %s140, 1
        %s241 = smul.addr %s240, 64
        %s242 = scalar_lea.vmem [#allocation5], %s241
        %v243 = vld [vmem:[%s216] sm:$0xff]
        %v244 = vld [vmem:[%s216 + $0x8] sm:$0xff]
        %v245 = vld [vmem:[%s216 + $0x10] sm:$0xff]
        %v246 = vld [vmem:[%s216 + $0x18] sm:$0xff]
        %v247 = vld [vmem:[%s216 + $0x20] sm:$0xff]
        %v248 = vld [vmem:[%s216 + $0x28] sm:$0xff]
        %v249 = vld [vmem:[%s216 + $0x30] sm:$0xff]
        %v250 = vld [vmem:[%s216 + $0x38] sm:$0xff]
        %v251 = vadd.f32 %v243, %v244
        %252 = vadd.xlane.f32.xlu0 %v251
        %v253 = vpop.xlane.xlu0 %252
        %v254 = vadd.f32 %v245, %v246
        %255 = vadd.xlane.f32.xlu0 %v254
        %v256 = vpop.xlane.xlu0 %255
        %v257 = vadd.f32 %v247, %v248
        %258 = vadd.xlane.f32.xlu0 %v257
        %v259 = vpop.xlane.xlu0 %258
        %v260 = vadd.f32 %v249, %v250
        %261 = vadd.xlane.f32.xlu0 %v260
        %v262 = vpop.xlane.xlu0 %261
        %v263 = vmul.f32 %v253, 0.00390625
        %v264 = vmul.f32 %v256, 0.00390625
        %v265 = vmul.f32 %v259, 0.00390625
        %v266 = vmul.f32 %v262, 0.00390625
        %v267 = vmax.f32 %v243, %v244
        %268 = vmax.xlane.f32.xlu0 %v267
        %v269 = vpop.xlane.xlu0 %268
        %v270 = vmax.f32 %v245, %v246
        %271 = vmax.xlane.f32.xlu0 %v270
        %v272 = vpop.xlane.xlu0 %271
        %v273 = vmax.f32 %v247, %v248
        %274 = vmax.xlane.f32.xlu0 %v273
        %v275 = vpop.xlane.xlu0 %274
        %v276 = vmax.f32 %v249, %v250
        %277 = vmax.xlane.f32.xlu0 %v276
        %v278 = vpop.xlane.xlu0 %277
        %v279 = vld [vmem:[%s1] sm:$0xff]
        %v280 = vld [vmem:[%s1 + $0x8] sm:$0xff]
        %v281 = vld [vmem:[%s1 + $0x10] sm:$0xff]
        %v282 = vld [vmem:[%s1 + $0x18] sm:$0xff]
        %v287 = vlaneseq
        %v288 = vand.u32 %v287, 127
        %v289 = vlaneseq
        %v290 = vshrl.u32 %v289, 7
        %v291 = vsub.s32 %v288, %v290
        %v292 = vrot.slane %v263, %v291
        %v293 = vadd.s32 %v288, 4294967288
        %v294 = vlaneseq
        %v295 = vshrl.u32 %v294, 7
        %v296 = vsub.s32 %v293, %v295
        %v297 = vrot.slane %v264, %v296
        %vm298 = vcmask 130112
        %v299 = vsel %vm298, %v297, %v292
        %v300 = vadd.s32 %v288, 4294967280
        %v301 = vlaneseq
        %v302 = vshrl.u32 %v301, 7
        %v303 = vsub.s32 %v300, %v302
        %v304 = vrot.slane %v265, %v303
        %vm305 = vcmask 195712
        %v306 = vsel %vm305, %v304, %v299
        %v307 = vadd.s32 %v288, 4294967272
        %v308 = vlaneseq
        %v309 = vshrl.u32 %v308, 7
        %v310 = vsub.s32 %v307, %v309
        %v311 = vrot.slane %v266, %v310
        %vm312 = vcmask 261312
        %v313 = vsel %vm312, %v311, %v306
        %vm314 = vcmask 261120
        %v315 = vsel %vm314, %v313, 0
        %317 = vmatprep.subr.mxu0 0.0
        %318 = vmatpush1.msra.mxu0 0.0
        %319 = vmatprep.subr.mxu0 0.0
        %320 = vmatpush1.msra.mxu0 0.0
        %321 = vmatprep.subr.mxu0 0.0
        %322 = vmatpush1.msra.mxu0 0.0
        %323 = vmatprep.subr.mxu0 0.0
        %324 = vmatpush1.msra.mxu0 0.0
        %325 = vmatprep.subr.mxu0 0.0
        %326 = vmatpush1.msra.mxu0 0.0
        %327 = vmatprep.subr.mxu0 0.0
        %328 = vmatpush1.msra.mxu0 0.0
        %329 = vmatprep.subr.mxu0 0.0
        %330 = vmatpush1.msra.mxu0 0.0
        %331 = vmatprep.subr.mxu0 0.0
        %332 = vmatpush1.msra.mxu0 0.0
        %333 = vmatprep.subr.mxu0 0.0
        %334 = vmatpush1.msra.mxu0 0.0
        %335 = vmatprep.subr.mxu0 0.0
        %336 = vmatpush1.msra.mxu0 0.0
        %337 = vmatprep.subr.mxu0 0.0
        %338 = vmatpush1.msra.mxu0 0.0
        %339 = vmatprep.subr.mxu0 0.0
        %340 = vmatpush1.msra.mxu0 0.0
        %341 = vmatprep.subr.mxu0 0.0
        %342 = vmatpush1.msra.mxu0 %v282
        %343 = vmatprep.subr.mxu0 0.0
        %344 = vmatpush1.msra.mxu0 %v281
        %345 = vmatprep.subr.mxu0 0.0
        %346 = vmatpush1.msra.mxu0 %v280
        %347 = vmatprep.subr.mxu0 0.0
        %348 = vmatpush1.msra.mxu0 %v279
        %349 = vmatprep.subr.mxu0 0.0
        %350 = vmatpush2.msra.mxu0 0.0
        %351 = vmatprep.subr.mxu0 0.0
        %352 = vmatpush2.msra.mxu0 0.0
        %353 = vmatprep.subr.mxu0 0.0
        %354 = vmatpush2.msra.mxu0 0.0
        %355 = vmatprep.subr.mxu0 0.0
        %356 = vmatpush2.msra.mxu0 0.0
        %357 = vmatprep.subr.mxu0 0.0
        %358 = vmatpush2.msra.mxu0 0.0
        %359 = vmatprep.subr.mxu0 0.0
        %360 = vmatpush2.msra.mxu0 0.0
        %361 = vmatprep.subr.mxu0 0.0
        %362 = vmatpush2.msra.mxu0 0.0
        %363 = vmatprep.subr.mxu0 0.0
        %364 = vmatpush2.msra.mxu0 0.0
        %365 = vmatprep.subr.mxu0 0.0
        %366 = vmatpush2.msra.mxu0 0.0
        %367 = vmatprep.subr.mxu0 0.0
        %368 = vmatpush2.msra.mxu0 0.0
        %369 = vmatprep.subr.mxu0 0.0
        %370 = vmatpush2.msra.mxu0 0.0
        %371 = vmatprep.subr.mxu0 0.0
        %372 = vmatpush2.msra.mxu0 0.0
        %373 = vmatprep.subr.mxu0 0.0
        %374 = vmatpush2.msra.mxu0 0.0
        %375 = vmatprep.subr.mxu0 0.0
        %376 = vmatpush2.msra.mxu0 0.0
        %377 = vmatprep.subr.mxu0 0.0
        %378 = vmatpush2.msra.mxu0 0.0
        %379 = vmatprep.subr.mxu0 0.0
        %380 = vmatpush2.msra.mxu0 0.0
        %381 = vmatprep.mubr.f32.mxu0 0.0
        %382 = vmatmul.mubr.f32.gmra.mxu0 %v315
        %v383 = vpop.f32.mrf.mxu0
        %v384 = vadd.f32 0.0, %v383
        %v385 = vpop.f32.mrf.mxu0
        %386 = vdwg.mxu0
        %v387 = vmax.f32 %v384, 0.0
        %v388 = vld [vmem:[%s2] sm:$0xff]
        %v389 = vld [vmem:[%s2 + $0x8] sm:$0xff]
        %v390 = vld [vmem:[%s2 + $0x10] sm:$0xff]
        %v391 = vld [vmem:[%s2 + $0x18] sm:$0xff]
        %v396 = vlaneseq
        %v397 = vshrl.u32 %v396, 7
        %v398 = vsub.s32 %v288, %v397
        %v399 = vrot.slane %v269, %v398
        %v400 = vlaneseq
        %v401 = vshrl.u32 %v400, 7
        %v402 = vsub.s32 %v293, %v401
        %v403 = vrot.slane %v272, %v402
        %v404 = vsel %vm298, %v403, %v399
        %v405 = vlaneseq
        %v406 = vshrl.u32 %v405, 7
        %v407 = vsub.s32 %v300, %v406
        %v408 = vrot.slane %v275, %v407
        %v409 = vsel %vm305, %v408, %v404
        %v410 = vlaneseq
        %v411 = vshrl.u32 %v410, 7
        %v412 = vsub.s32 %v307, %v411
        %v413 = vrot.slane %v278, %v412
        %v414 = vsel %vm312, %v413, %v409
        %v415 = vsel %vm314, %v414, 0
        %417 = vmatprep.subr.mxu0 0.0
        %418 = vmatpush1.msra.mxu0 0.0
        %419 = vmatprep.subr.mxu0 0.0
        %420 = vmatpush1.msra.mxu0 0.0
        %421 = vmatprep.subr.mxu0 0.0
        %422 = vmatpush1.msra.mxu0 0.0
        %423 = vmatprep.subr.mxu0 0.0
        %424 = vmatpush1.msra.mxu0 0.0
        %425 = vmatprep.subr.mxu0 0.0
        %426 = vmatpush1.msra.mxu0 0.0
        %427 = vmatprep.subr.mxu0 0.0
        %428 = vmatpush1.msra.mxu0 0.0
        %429 = vmatprep.subr.mxu0 0.0
        %430 = vmatpush1.msra.mxu0 0.0
        %431 = vmatprep.subr.mxu0 0.0
        %432 = vmatpush1.msra.mxu0 0.0
        %433 = vmatprep.subr.mxu0 0.0
        %434 = vmatpush1.msra.mxu0 0.0
        %435 = vmatprep.subr.mxu0 0.0
        %436 = vmatpush1.msra.mxu0 0.0
        %437 = vmatprep.subr.mxu0 0.0
        %438 = vmatpush1.msra.mxu0 0.0
        %439 = vmatprep.subr.mxu0 0.0
        %440 = vmatpush1.msra.mxu0 0.0
        %441 = vmatprep.subr.mxu0 0.0
        %442 = vmatpush1.msra.mxu0 %v391
        %443 = vmatprep.subr.mxu0 0.0
        %444 = vmatpush1.msra.mxu0 %v390
        %445 = vmatprep.subr.mxu0 0.0
        %446 = vmatpush1.msra.mxu0 %v389
        %447 = vmatprep.subr.mxu0 0.0
        %448 = vmatpush1.msra.mxu0 %v388
        %449 = vmatprep.subr.mxu0 0.0
        %450 = vmatpush2.msra.mxu0 0.0
        %451 = vmatprep.subr.mxu0 0.0
        %452 = vmatpush2.msra.mxu0 0.0
        %453 = vmatprep.subr.mxu0 0.0
        %454 = vmatpush2.msra.mxu0 0.0
        %455 = vmatprep.subr.mxu0 0.0
        %456 = vmatpush2.msra.mxu0 0.0
        %457 = vmatprep.subr.mxu0 0.0
        %458 = vmatpush2.msra.mxu0 0.0
        %459 = vmatprep.subr.mxu0 0.0
        %460 = vmatpush2.msra.mxu0 0.0
        %461 = vmatprep.subr.mxu0 0.0
        %462 = vmatpush2.msra.mxu0 0.0
        %463 = vmatprep.subr.mxu0 0.0
        %464 = vmatpush2.msra.mxu0 0.0
        %465 = vmatprep.subr.mxu0 0.0
        %466 = vmatpush2.msra.mxu0 0.0
        %467 = vmatprep.subr.mxu0 0.0
        %468 = vmatpush2.msra.mxu0 0.0
        %469 = vmatprep.subr.mxu0 0.0
        %470 = vmatpush2.msra.mxu0 0.0
        %471 = vmatprep.subr.mxu0 0.0
        %472 = vmatpush2.msra.mxu0 0.0
        %473 = vmatprep.subr.mxu0 0.0
        %474 = vmatpush2.msra.mxu0 0.0
        %475 = vmatprep.subr.mxu0 0.0
        %476 = vmatpush2.msra.mxu0 0.0
        %477 = vmatprep.subr.mxu0 0.0
        %478 = vmatpush2.msra.mxu0 0.0
        %479 = vmatprep.subr.mxu0 0.0
        %480 = vmatpush2.msra.mxu0 0.0
        %481 = vmatprep.mubr.f32.mxu0 0.0
        %482 = vmatmul.mubr.f32.gmra.mxu0 %v415
        %v483 = vpop.f32.mrf.mxu0
        %v484 = vadd.f32 0.0, %v483
        %v485 = vpop.f32.mrf.mxu0
        %486 = vdwg.mxu0
        %v487 = vmax.f32 %v484, 0.0
        %v488 = vld [vmem:[%s3] sm:$0xff]
        %v489 = vld [vmem:[%s4] sm:$0xff]
        %vm490 = vcmask 64512
        %v492 = vsel %vm490, %v487, 0
        %494 = vmatprep.subr.mxu0 0.0
        %495 = vmatpush1.msra.mxu0 0.0
        %496 = vmatprep.subr.mxu0 0.0
        %497 = vmatpush1.msra.mxu0 0.0
        %498 = vmatprep.subr.mxu0 0.0
        %499 = vmatpush1.msra.mxu0 0.0
        %500 = vmatprep.subr.mxu0 0.0
        %501 = vmatpush1.msra.mxu0 0.0
        %502 = vmatprep.subr.mxu0 0.0
        %503 = vmatpush1.msra.mxu0 0.0
        %504 = vmatprep.subr.mxu0 0.0
        %505 = vmatpush1.msra.mxu0 0.0
        %506 = vmatprep.subr.mxu0 0.0
        %507 = vmatpush1.msra.mxu0 0.0
        %508 = vmatprep.subr.mxu0 0.0
        %509 = vmatpush1.msra.mxu0 0.0
        %510 = vmatprep.subr.mxu0 0.0
        %511 = vmatpush1.msra.mxu0 0.0
        %512 = vmatprep.subr.mxu0 0.0
        %513 = vmatpush1.msra.mxu0 0.0
        %514 = vmatprep.subr.mxu0 0.0
        %515 = vmatpush1.msra.mxu0 0.0
        %516 = vmatprep.subr.mxu0 0.0
        %517 = vmatpush1.msra.mxu0 0.0
        %518 = vmatprep.subr.mxu0 0.0
        %519 = vmatpush1.msra.mxu0 0.0
        %520 = vmatprep.subr.mxu0 0.0
        %521 = vmatpush1.msra.mxu0 0.0
        %522 = vmatprep.subr.mxu0 0.0
        %523 = vmatpush1.msra.mxu0 0.0
        %524 = vmatprep.subr.mxu0 0.0
        %525 = vmatpush1.msra.mxu0 %v489
        %526 = vmatprep.subr.mxu0 0.0
        %527 = vmatpush2.msra.mxu0 0.0
        %528 = vmatprep.subr.mxu0 0.0
        %529 = vmatpush2.msra.mxu0 0.0
        %530 = vmatprep.subr.mxu0 0.0
        %531 = vmatpush2.msra.mxu0 0.0
        %532 = vmatprep.subr.mxu0 0.0
        %533 = vmatpush2.msra.mxu0 0.0
        %534 = vmatprep.subr.mxu0 0.0
        %535 = vmatpush2.msra.mxu0 0.0
        %536 = vmatprep.subr.mxu0 0.0
        %537 = vmatpush2.msra.mxu0 0.0
        %538 = vmatprep.subr.mxu0 0.0
        %539 = vmatpush2.msra.mxu0 0.0
        %540 = vmatprep.subr.mxu0 0.0
        %541 = vmatpush2.msra.mxu0 0.0
        %542 = vmatprep.subr.mxu0 0.0
        %543 = vmatpush2.msra.mxu0 0.0
        %544 = vmatprep.subr.mxu0 0.0
        %545 = vmatpush2.msra.mxu0 0.0
        %546 = vmatprep.subr.mxu0 0.0
        %547 = vmatpush2.msra.mxu0 0.0
        %548 = vmatprep.subr.mxu0 0.0
        %549 = vmatpush2.msra.mxu0 0.0
        %550 = vmatprep.subr.mxu0 0.0
        %551 = vmatpush2.msra.mxu0 0.0
        %552 = vmatprep.subr.mxu0 0.0
        %553 = vmatpush2.msra.mxu0 0.0
        %554 = vmatprep.subr.mxu0 0.0
        %555 = vmatpush2.msra.mxu0 0.0
        %556 = vmatprep.subr.mxu0 0.0
        %557 = vmatpush2.msra.mxu0 0.0
        %558 = vmatprep.mubr.f32.mxu0 0.0
        %559 = vmatmul.mubr.f32.gmra.mxu0 %v492
        %v560 = vpop.f32.mrf.mxu0
        %v561 = vadd.f32 0.0, %v560
        %v562 = vpop.f32.mrf.mxu0
        %563 = vdwg.mxu0
        %v565 = vsel %vm490, %v387, 0
        %567 = vmatprep.subr.mxu0 0.0
        %568 = vmatpush1.msra.mxu0 0.0
        %569 = vmatprep.subr.mxu0 0.0
        %570 = vmatpush1.msra.mxu0 0.0
        %571 = vmatprep.subr.mxu0 0.0
        %572 = vmatpush1.msra.mxu0 0.0
        %573 = vmatprep.subr.mxu0 0.0
        %574 = vmatpush1.msra.mxu0 0.0
        %575 = vmatprep.subr.mxu0 0.0
        %576 = vmatpush1.msra.mxu0 0.0
        %577 = vmatprep.subr.mxu0 0.0
        %578 = vmatpush1.msra.mxu0 0.0
        %579 = vmatprep.subr.mxu0 0.0
        %580 = vmatpush1.msra.mxu0 0.0
        %581 = vmatprep.subr.mxu0 0.0
        %582 = vmatpush1.msra.mxu0 0.0
        %583 = vmatprep.subr.mxu0 0.0
        %584 = vmatpush1.msra.mxu0 0.0
        %585 = vmatprep.subr.mxu0 0.0
        %586 = vmatpush1.msra.mxu0 0.0
        %587 = vmatprep.subr.mxu0 0.0
        %588 = vmatpush1.msra.mxu0 0.0
        %589 = vmatprep.subr.mxu0 0.0
        %590 = vmatpush1.msra.mxu0 0.0
        %591 = vmatprep.subr.mxu0 0.0
        %592 = vmatpush1.msra.mxu0 0.0
        %593 = vmatprep.subr.mxu0 0.0
        %594 = vmatpush1.msra.mxu0 0.0
        %595 = vmatprep.subr.mxu0 0.0
        %596 = vmatpush1.msra.mxu0 0.0
        %597 = vmatprep.subr.mxu0 0.0
        %598 = vmatpush1.msra.mxu0 %v488
        %599 = vmatprep.subr.mxu0 0.0
        %600 = vmatpush2.msra.mxu0 0.0
        %601 = vmatprep.subr.mxu0 0.0
        %602 = vmatpush2.msra.mxu0 0.0
        %603 = vmatprep.subr.mxu0 0.0
        %604 = vmatpush2.msra.mxu0 0.0
        %605 = vmatprep.subr.mxu0 0.0
        %606 = vmatpush2.msra.mxu0 0.0
        %607 = vmatprep.subr.mxu0 0.0
        %608 = vmatpush2.msra.mxu0 0.0
        %609 = vmatprep.subr.mxu0 0.0
        %610 = vmatpush2.msra.mxu0 0.0
        %611 = vmatprep.subr.mxu0 0.0
        %612 = vmatpush2.msra.mxu0 0.0
        %613 = vmatprep.subr.mxu0 0.0
        %614 = vmatpush2.msra.mxu0 0.0
        %615 = vmatprep.subr.mxu0 0.0
        %616 = vmatpush2.msra.mxu0 0.0
        %617 = vmatprep.subr.mxu0 0.0
        %618 = vmatpush2.msra.mxu0 0.0
        %619 = vmatprep.subr.mxu0 0.0
        %620 = vmatpush2.msra.mxu0 0.0
        %621 = vmatprep.subr.mxu0 0.0
        %622 = vmatpush2.msra.mxu0 0.0
        %623 = vmatprep.subr.mxu0 0.0
        %624 = vmatpush2.msra.mxu0 0.0
        %625 = vmatprep.subr.mxu0 0.0
        %626 = vmatpush2.msra.mxu0 0.0
        %627 = vmatprep.subr.mxu0 0.0
        %628 = vmatpush2.msra.mxu0 0.0
        %629 = vmatprep.subr.mxu0 0.0
        %630 = vmatpush2.msra.mxu0 0.0
        %631 = vmatprep.mubr.f32.mxu0 0.0
        %632 = vmatmul.mubr.f32.gmra.mxu0 %v565
        %v633 = vpop.f32.mrf.mxu0
        %v634 = vadd.f32 %v561, %v633
        %v635 = vpop.f32.mrf.mxu0
        %636 = vdwg.mxu0
        %v637 = vsub.f32 0.0, %v634
        %v638 = vmul.f32 %v637, 1.442695
        %v639 = vpow.pop %v638
        %v640 = vadd.f32 %v639, 1.0
        %v641 = vrcp.pop %v640
        %v642 = vmul.f32 1.0, %v641
        %v643 = vlaneseq
        %v644 = vshrl.u32 %v643, 7
        %v645 = vsub.s32 0, %v644
        %v646 = vrot.slane %v642, %v645
        %648 = vbcast.lane.b32.xlu0 %v646, 256
        %v649 = vpop.permute.xlu0 %648
        %s651 = sor.u32 256, 8
        %652 = vbcast.lane.b32.xlu0 %v646, %s651
        %v653 = vpop.permute.xlu0 %652
        %s655 = sor.u32 256, 16
        %656 = vbcast.lane.b32.xlu0 %v646, %s655
        %v657 = vpop.permute.xlu0 %656
        %s659 = sor.u32 256, 24
        %660 = vbcast.lane.b32.xlu0 %v646, %s659
        %v661 = vpop.permute.xlu0 %660
        %v662 = vmul.f32 %v243, %v649
        %v663 = vmul.f32 %v244, %v649
        %v664 = vmul.f32 %v245, %v653
        %v665 = vmul.f32 %v246, %v653
        %v666 = vmul.f32 %v247, %v657
        %v667 = vmul.f32 %v248, %v657
        %v668 = vmul.f32 %v249, %v661
        %v669 = vmul.f32 %v250, %v661
        %670 = vst [vmem:[%s242] sm:$0xff] %v662
        %671 = vst [vmem:[%s242 + $0x8] sm:$0xff] %v663
        %672 = vst [vmem:[%s242 + $0x10] sm:$0xff] %v664
        %673 = vst [vmem:[%s242 + $0x18] sm:$0xff] %v665
        %674 = vst [vmem:[%s242 + $0x20] sm:$0xff] %v666
        %675 = vst [vmem:[%s242 + $0x28] sm:$0xff] %v667
        %676 = vst [vmem:[%s242 + $0x30] sm:$0xff] %v668
        %677 = vst [vmem:[%s242 + $0x38] sm:$0xff] %v669
        %s678 = sand.u32 %s140, 1
        %s679 = scalar_lea.sflag [#allocation4], %s678
        %s680 = sand.u32 %s140, 1
        %s681 = smul.addr %s680, 64
        %s682 = scalar_lea.vmem [#allocation5], %s681
        // Predicated region
        $region45: #{tpu_custom_call.1} parent=39 // pred_check
          %p683 = pneg %p150
        $region46: #{tpu_custom_call.1} parent=39 // pred_check_branch
          %685 = sbr.rel (%p683) target = $region48
        $region47: #{tpu_custom_call.1} parent=39 // pred_region
          %s687 = ssub.s32 1024, 1024
          %688 = vsyncadd %s679, %s687
          %s689 = smul.addr %s22, 8
          %s690 = smul.addr %s689, 128
          %s691 = scalar_lea.hbm %s5, %s690
          %s692 = sshll.u32 %s682, 4
          %s693 = int_to_ptr.vmem [resolvable:$true] %s692
          %698 = dma.vmem_to_hbm [thread:$0]  %s693, 1024, %s691, %s679, 256, 256, 16
        $region48: #{tpu_custom_call.1} parent=39 // pred_fallthru
          _
      $region40: #{tpu_custom_call.1} parent=5 // pred_fallthru
        _
      %p699 = scmp.le.s32.totalorder 2, %s17
      // Predicated region
      $region49: #{tpu_custom_call.1} parent=5 // pred_check
        %p700 = pneg %p699
      $region50: #{tpu_custom_call.1} parent=5 // pred_check_branch
        %702 = sbr.rel (%p700) target = $region52
      $region51: #{tpu_custom_call.1} parent=5 // pred_region
        %s703 = ssub.s32 %s17, 2
        // Predicated region
        $region53: #{tpu_custom_call.1} parent=51 // pred_check
          %p704 = pneg %p156
        $region54: #{tpu_custom_call.1} parent=51 // pred_check_branch
          %706 = sbr.rel (%p704) target = $region56
        $region55: #{tpu_custom_call.1} parent=51 // pred_region
          %s707 = sand.u32 %s141, 1
          %s708 = scalar_lea.sflag [#allocation4], %s707
          %s709 = sand.u32 %s141, 1
          %s710 = smul.addr %s709, 64
          %s711 = scalar_lea.vmem [#allocation5], %s710
          %712 = dma.done %s708, 1024
        $region56: #{tpu_custom_call.1} parent=51 // pred_fallthru
          _
      $region52: #{tpu_custom_call.1} parent=5 // pred_fallthru
        _
    $region6: #{tpu_custom_call.1} parent=1 // loop_footer
      %s21 = sadd.s32 1, %s17
    $region7: #{tpu_custom_call.1} parent=1 // loop_footer_branch
      %16 = sbr.rel target = $region3
    $region8: #{tpu_custom_call.1} parent=1 // loop_exit
      _
    %713 = vsyncpa [#allocation3], 1
    %s714 = scalar_lea.sflag [#allocation3], 1
    %715 = vsyncpa %s714, 1
    %716 = vsyncpa [#allocation4], 1
    %s717 = scalar_lea.sflag [#allocation4], 1
    %718 = vsyncpa %s717, 1

</llo_original>
